<compile_context>
chip_gen: v6e
topology: v6e:2x2x1
jax: 0.10.0
libtpu: 0.0.40
codegen_flags: <defaults>
</compile_context>

<pallas_src>
import functools

import jax
import jax.numpy as jnp
from jax.experimental import pallas as pl
from jax.experimental.pallas import tpu as pltpu

_LANE = 128
_BN_EPS = 1e-5


# ----------------------------------------------------------------------------- kernel
def generator_kernel(x_ref, w1_ref, b1_ref, w2_ref, bn_shift_ref, wo_ref,
                     bo_ref, out_ref, *, approx_sigmoid=False):
    # Cast the streamed activations to the MXU dtype inside the kernel (no
    # separate XLA cast pass over the batch in HBM).
    x = x_ref[...].astype(w1_ref.dtype)

    # Hidden layer 0: Linear (MXU, f32 accumulate) + bias + ReLU (f32 on VPU).
    h1 = jnp.dot(x, w1_ref[...], preferred_element_type=jnp.float32) + b1_ref[...]
    h1 = jnp.maximum(h1, 0.0).astype(w2_ref.dtype)

    # Hidden layer 1: Linear with BN scale pre-folded into W2's columns,
    # b2 + BN shift pre-folded into bn_shift, then ReLU.
    z2 = jnp.dot(h1, w2_ref[...], preferred_element_type=jnp.float32) + bn_shift_ref[...]
    h2 = jnp.maximum(z2, 0.0).astype(wo_ref.dtype)

    # Output layer: Linear + Sigmoid over the lane-padded (128-wide) slab.
    zo = jnp.dot(h2, wo_ref[...], preferred_element_type=jnp.float32) + bo_ref[...]
    if approx_sigmoid:
        # exp + approx reciprocal both live on the EUP slot (keeps the divide
        # off the VPU).
        s = pl.reciprocal(1.0 + jnp.exp(-zo), approx=True)
    else:
        s = jax.nn.sigmoid(zo)
    out_ref[...] = s.astype(out_ref.dtype)


# ----------------------------------------------------------------------- param prep
def _pad2(a, rows, cols):
    return jnp.pad(a, ((0, rows - a.shape[0]), (0, cols - a.shape[1])))


def prepare_params(params, *, compute_dtype=jnp.float32):
    """One-time (load-time) parameter preparation.

    Folds eval-mode BatchNorm (+ b2) into W2 / a shift vector, zero-pads the
    hidden dims and the output dim to 128 lanes, and casts the MXU operands to
    `compute_dtype`.  Call once; reuse the result for every forward.
    """
    (w1, b1, w2, b2, gamma, beta, run_mean, run_var, wo, bo) = params
    noise_size, h1 = w1.shape
    h2 = w2.shape[1]
    out_size = wo.shape[1]

    h1_pad = pl.cdiv(h1, _LANE) * _LANE
    h2_pad = pl.cdiv(h2, _LANE) * _LANE
    out_pad = pl.cdiv(out_size, _LANE) * _LANE

    # Fold eval-mode BatchNorm1d: scale into W2's columns (pre-ReLU => sign
    # safe), shift absorbs b2.
    inv_std = gamma / jnp.sqrt(run_var + _BN_EPS)
    w2_scaled = w2 * inv_std[None, :]
    bn_shift = beta + (b2 - run_mean) * inv_std

    # Lane padding (zero pad -> padded hidden/output columns stay exactly 0
    # through bias+ReLU and contribute nothing downstream).
    w1_p = _pad2(w1, noise_size, h1_pad)
    b1_p = jnp.pad(b1, ((0, h1_pad - h1),)).reshape(1, h1_pad)
    w2_p = _pad2(w2_scaled, h1_pad, h2_pad)
    bn_shift_p = jnp.pad(bn_shift, ((0, h2_pad - h2),)).reshape(1, h2_pad)
    wo_p = _pad2(wo, h2_pad, out_pad)
    bo_p = jnp.pad(bo, ((0, out_pad - out_size),)).reshape(1, out_pad)

    prepped = {
        "w1": w1_p.astype(compute_dtype),
        "b1": b1_p.astype(jnp.float32),
        "w2": w2_p.astype(compute_dtype),
        "bn_shift": bn_shift_p.astype(jnp.float32),
        "wo": wo_p.astype(compute_dtype),
        "bo": bo_p.astype(jnp.float32),
        "out_size": out_size,
        "out_pad": out_pad,
        "compute_dtype": compute_dtype,
    }
    return prepped


# --------------------------------------------------------------------------- forward
def generator_forward(noise, prepped, *, tile_b=None, out_dtype=jnp.float32,
                      unpad_output=True, approx_sigmoid=False):
    """Fused Generator forward as a single Pallas kernel, tiled over batch.

    `prepped` comes from prepare_params(); no weight padding / casting / BN
    algebra happens here -- the only wrapper ops are (optional) batch padding
    and the final un-pad slice.
    """
    compute_dtype = prepped["compute_dtype"]
    out_size = prepped["out_size"]
    out_pad = prepped["out_pad"]
    B, noise_size = noise.shape

    # --- tile selection -------------------------------------------------------
    sub = 16 if compute_dtype == jnp.bfloat16 else 8          # sublane packing
    if tile_b is None:
        tile_b = 1024 if compute_dtype == jnp.bfloat16 else 512
    tile_b = pl.cdiv(tile_b, sub) * sub
    if B <= tile_b:
        if B >= 512:
            # Force >= 2 grid steps so the "parallel" batch axis can shard
            # across v7x's two TensorCores (neutral on single-TC v5e/v6e).
            tile_b = pl.cdiv(pl.cdiv(B, 2), sub) * sub
        else:
            # Small batch: one grid step covering the whole padded batch.
            tile_b = max(sub, pl.cdiv(B, sub) * sub)
    b_pad = pl.cdiv(B, tile_b) * tile_b
    if b_pad != B:
        noise = jnp.pad(noise, ((0, b_pad - B), (0, 0)))

    h1_pad = prepped["w1"].shape[1]
    h2_pad = prepped["w2"].shape[1]

    grid = (b_pad // tile_b,)
    full = lambda shape: pl.BlockSpec(shape, lambda i: (0, 0))

    kernel = functools.partial(generator_kernel, approx_sigmoid=approx_sigmoid)

    out = pl.pallas_call(
        kernel,
        out_shape=jax.ShapeDtypeStruct((b_pad, out_pad), out_dtype),
        grid_spec=pltpu.PrefetchScalarGridSpec(
            num_scalar_prefetch=0,
            grid=grid,
            in_specs=[
                pl.BlockSpec((tile_b, noise_size), lambda i: (i, 0)),  # noise tile
                full((noise_size, h1_pad)),                            # W1
                full((1, h1_pad)),                                     # b1
                full((h1_pad, h2_pad)),                                # W2 (BN scale folded)
                full((1, h2_pad)),                                     # bn_shift (b2 folded)
                full((h2_pad, out_pad)),                               # Wout (lane padded)
                full((1, out_pad)),                                    # bout (lane padded)
            ],
            out_specs=pl.BlockSpec((tile_b, out_pad), lambda i: (i, 0)),
        ),
        compiler_params=pltpu.CompilerParams(
            dimension_semantics=("parallel",)),
    )(noise, prepped["w1"], prepped["b1"], prepped["w2"], prepped["bn_shift"],
      prepped["wo"], prepped["bo"])

    if unpad_output:
        return out[:B, :out_size]
    return out  # lane-padded (b_pad, 128) slab; real data is [:B, :out_size]


# ------------------------------------------------------------------------ test utils
def init_params(key, noise_size, hidden_sizes, output_size):
    """Deterministic synthetic parameters (PyTorch-style uniform fan-in init)."""
    h1, h2 = hidden_sizes
    keys = jax.random.split(key, 7)

    def lin(k, fan_in, fan_out):
        kw, kb = jax.random.split(k)
        bound = 1.0 / jnp.sqrt(fan_in)
        # stored as (in, out) == transposed PyTorch Linear weight
        w = jax.random.uniform(kw, (fan_in, fan_out), jnp.float32, -bound, bound)
        b = jax.random.uniform(kb, (fan_out,), jnp.float32, -bound, bound)
        return w, b

    w1, b1 = lin(keys[0], noise_size, h1)
    w2, b2 = lin(keys[1], h1, h2)
    wo, bo = lin(keys[2], h2, output_size)

    # BatchNorm1d(h2) affine parameters / running stats.
    gamma = 1.0 + 0.1 * jax.random.normal(keys[3], (h2,), jnp.float32)
    beta = 0.1 * jax.random.normal(keys[4], (h2,), jnp.float32)
    run_mean = 0.05 * jax.random.normal(keys[5], (h2,), jnp.float32)
    run_var = jnp.abs(1.0 + 0.1 * jax.random.normal(keys[6], (h2,), jnp.float32))

    return (w1, b1, w2, b2, gamma, beta, run_mean, run_var, wo, bo)


def reference_forward(noise, params):
    (w1, b1, w2, b2, gamma, beta, run_mean, run_var, wo, bo) = params
    h1 = jnp.maximum(noise @ w1 + b1, 0.0)
    z2 = h1 @ w2 + b2
    z2 = (z2 - run_mean) / jnp.sqrt(run_var + _BN_EPS) * gamma + beta
    h2 = jnp.maximum(z2, 0.0)
    return jax.nn.sigmoid(h2 @ wo + bo)


if __name__ == "__main__":
    noise_size = 32
    hidden_sizes = [64, 64]
    output_size = 16

    key = jax.random.PRNGKey(0)
    k_noise, k_params = jax.random.split(key)
    params = init_params(k_params, noise_size, hidden_sizes, output_size)

    # One-time parameter prep (padding / BN fold / casts) -- out of the hot path.
    prepped_f32 = prepare_params(params, compute_dtype=jnp.float32)
    prepped_bf16 = prepare_params(params, compute_dtype=jnp.bfloat16)

    # Case 1: small, non-multiple-of-8 batch -> single grid step, padded batch.
    batch = 50
    noise = jax.random.normal(k_noise, (batch, noise_size), jnp.float32)
    out = jax.block_until_ready(generator_forward(noise, prepped_f32))
    ref = reference_forward(noise, params)
    assert out.shape == (batch, output_size)
    assert jnp.allclose(out, ref, atol=1e-5, rtol=1e-5), "f32 small-batch mismatch"

    # Case 2: larger batch -> multi-step "parallel" grid with batch padding.
    batch2 = 300
    noise2 = jax.random.normal(jax.random.fold_in(k_noise, 1),
                               (batch2, noise_size), jnp.float32)
    out2 = jax.block_until_ready(
        generator_forward(noise2, prepped_f32, tile_b=128))
    ref2 = reference_forward(noise2, params)
    assert out2.shape == (batch2, output_size)
    assert jnp.allclose(out2, ref2, atol=1e-5, rtol=1e-5), "f32 tiled mismatch"

    # Case 3: bf16 MXU operands, bf16 output, EUP-only approx sigmoid.
    out3 = jax.block_until_ready(
        generator_forward(noise, prepped_bf16, out_dtype=jnp.bfloat16,
                          approx_sigmoid=True))
    assert out3.shape == (batch, output_size)
    assert jnp.allclose(out3.astype(jnp.float32), ref, atol=3e-2, rtol=3e-2), \
        "bf16 mismatch"

    # Case 4: lane-padded slab returned directly (no post-kernel slice pass).
    out4 = jax.block_until_ready(
        generator_forward(noise, prepped_f32, unpad_output=False))
    assert out4.shape[1] == 128 and out4.shape[0] >= batch
    assert jnp.allclose(out4[:batch, :output_size], ref, atol=1e-5, rtol=1e-5), \
        "padded-slab mismatch"

    print("KERNEL_OK")
</pallas_src>

<mosaic_0001>
module attributes {stable_mosaic.version = 11 : i64} {
  func.func @generator_kernel(%arg0: i32, %arg1: memref<56x32xf32, #tpu.memory_space<vmem>>, %arg2: memref<32x128xf32, #tpu.memory_space<vmem>>, %arg3: memref<1x128xf32, #tpu.memory_space<vmem>>, %arg4: memref<128x128xf32, #tpu.memory_space<vmem>>, %arg5: memref<1x128xf32, #tpu.memory_space<vmem>>, %arg6: memref<128x128xf32, #tpu.memory_space<vmem>>, %arg7: memref<1x128xf32, #tpu.memory_space<vmem>>, %arg8: memref<56x128xf32, #tpu.memory_space<vmem>>) attributes {dimension_semantics = [#tpu.dimension_semantics<parallel>], iteration_bounds = array<i64: 1>, scalar_prefetch = 0 : i64, scratch_operands = 0 : i64, tpu.core_type = #tpu.core_type<tc>, window_params = [{transform_indices = @transform_0, window_bounds = array<i64: 56, 32>}, {pipeline_mode = #tpu.pipeline_mode<synchronous>, transform_indices = @transform_1, window_bounds = array<i64: 32, 128>}, {pipeline_mode = #tpu.pipeline_mode<synchronous>, transform_indices = @transform_2, window_bounds = array<i64: 1, 128>}, {pipeline_mode = #tpu.pipeline_mode<synchronous>, transform_indices = @transform_3, window_bounds = array<i64: 128, 128>}, {pipeline_mode = #tpu.pipeline_mode<synchronous>, transform_indices = @transform_4, window_bounds = array<i64: 1, 128>}, {pipeline_mode = #tpu.pipeline_mode<synchronous>, transform_indices = @transform_5, window_bounds = array<i64: 128, 128>}, {pipeline_mode = #tpu.pipeline_mode<synchronous>, transform_indices = @transform_6, window_bounds = array<i64: 1, 128>}, {transform_indices = @transform_7, window_bounds = array<i64: 56, 128>}]} {
    %c0 = arith.constant 0 : index
    %c0_0 = arith.constant 0 : index
    %0 = vector.load %arg1[%c0, %c0_0] : memref<56x32xf32, #tpu.memory_space<vmem>>, vector<56x32xf32>
    %c0_1 = arith.constant 0 : index
    %c0_2 = arith.constant 0 : index
    %1 = vector.load %arg2[%c0_1, %c0_2] : memref<32x128xf32, #tpu.memory_space<vmem>>, vector<32x128xf32>
    %cst = arith.constant dense<0.000000e+00> : vector<56x128xf32>
    %2 = tpu.matmul %0, %1, %cst {dimension_numbers = #tpu.dot_dimension_numbers<[1], [0], [0], [1], [0, 0, 1, 1], [], []>} : vector<56x32xf32>, vector<32x128xf32>, vector<56x128xf32> -> vector<56x128xf32>
    %c0_3 = arith.constant 0 : index
    %c0_4 = arith.constant 0 : index
    %3 = vector.load %arg3[%c0_3, %c0_4] : memref<1x128xf32, #tpu.memory_space<vmem>>, vector<1x128xf32>
    %4 = vector.broadcast %3 : vector<1x128xf32> to vector<56x128xf32>
    %5 = arith.addf %2, %4 : vector<56x128xf32>
    %cst_5 = arith.constant 0.000000e+00 : f32
    %6 = vector.broadcast %cst_5 : f32 to vector<56x128xf32>
    %7 = arith.maximumf %5, %6 : vector<56x128xf32>
    %c0_6 = arith.constant 0 : index
    %c0_7 = arith.constant 0 : index
    %8 = vector.load %arg4[%c0_6, %c0_7] : memref<128x128xf32, #tpu.memory_space<vmem>>, vector<128x128xf32>
    %cst_8 = arith.constant dense<0.000000e+00> : vector<56x128xf32>
    %9 = tpu.matmul %7, %8, %cst_8 {dimension_numbers = #tpu.dot_dimension_numbers<[1], [0], [0], [1], [0, 0, 1, 1], [], []>} : vector<56x128xf32>, vector<128x128xf32>, vector<56x128xf32> -> vector<56x128xf32>
    %c0_9 = arith.constant 0 : index
    %c0_10 = arith.constant 0 : index
    %10 = vector.load %arg5[%c0_9, %c0_10] : memref<1x128xf32, #tpu.memory_space<vmem>>, vector<1x128xf32>
    %11 = vector.broadcast %10 : vector<1x128xf32> to vector<56x128xf32>
    %12 = arith.addf %9, %11 : vector<56x128xf32>
    %cst_11 = arith.constant 0.000000e+00 : f32
    %13 = vector.broadcast %cst_11 : f32 to vector<56x128xf32>
    %14 = arith.maximumf %12, %13 : vector<56x128xf32>
    %c0_12 = arith.constant 0 : index
    %c0_13 = arith.constant 0 : index
    %15 = vector.load %arg6[%c0_12, %c0_13] : memref<128x128xf32, #tpu.memory_space<vmem>>, vector<128x128xf32>
    %cst_14 = arith.constant dense<0.000000e+00> : vector<56x128xf32>
    %16 = tpu.matmul %14, %15, %cst_14 {dimension_numbers = #tpu.dot_dimension_numbers<[1], [0], [0], [1], [0, 0, 1, 1], [], []>} : vector<56x128xf32>, vector<128x128xf32>, vector<56x128xf32> -> vector<56x128xf32>
    %c0_15 = arith.constant 0 : index
    %c0_16 = arith.constant 0 : index
    %17 = vector.load %arg7[%c0_15, %c0_16] : memref<1x128xf32, #tpu.memory_space<vmem>>, vector<1x128xf32>
    %18 = vector.broadcast %17 : vector<1x128xf32> to vector<56x128xf32>
    %19 = arith.addf %16, %18 : vector<56x128xf32>
    %20 = arith.negf %19 : vector<56x128xf32>
    %21 = math.exp %20 : vector<56x128xf32>
    %cst_17 = arith.constant 1.000000e+00 : f32
    %22 = vector.broadcast %cst_17 : f32 to vector<56x128xf32>
    %23 = arith.addf %22, %21 : vector<56x128xf32>
    %24 = arith.divf %22, %23 : vector<56x128xf32>
    %c0_18 = arith.constant 0 : index
    %c0_19 = arith.constant 0 : index
    %25 = vector.load %arg8[%c0_18, %c0_19] : memref<56x128xf32, #tpu.memory_space<vmem>>, vector<56x128xf32>
    tpu.vector_store %arg8[%c0_18, %c0_19], %24 {strides = array<i32>} : memref<56x128xf32, #tpu.memory_space<vmem>>, vector<56x128xf32>,
    return
  }
  func.func @transform_0(%arg0: i32) -> (i32, i32) {
    %c0_i32 = arith.constant 0 : i32
    %c0_i32_0 = arith.constant 0 : i32
    return %arg0, %c0_i32 : i32, i32
  }
  func.func @transform_1(%arg0: i32) -> (i32, i32) {
    %c0_i32 = arith.constant 0 : i32
    %c0_i32_0 = arith.constant 0 : i32
    %c0_i32_1 = arith.constant 0 : i32
    return %c0_i32, %c0_i32_0 : i32, i32
  }
  func.func @transform_2(%arg0: i32) -> (i32, i32) {
    %c0_i32 = arith.constant 0 : i32
    %c0_i32_0 = arith.constant 0 : i32
    %c0_i32_1 = arith.constant 0 : i32
    return %c0_i32, %c0_i32_0 : i32, i32
  }
  func.func @transform_3(%arg0: i32) -> (i32, i32) {
    %c0_i32 = arith.constant 0 : i32
    %c0_i32_0 = arith.constant 0 : i32
    %c0_i32_1 = arith.constant 0 : i32
    return %c0_i32, %c0_i32_0 : i32, i32
  }
  func.func @transform_4(%arg0: i32) -> (i32, i32) {
    %c0_i32 = arith.constant 0 : i32
    %c0_i32_0 = arith.constant 0 : i32
    %c0_i32_1 = arith.constant 0 : i32
    return %c0_i32, %c0_i32_0 : i32, i32
  }
  func.func @transform_5(%arg0: i32) -> (i32, i32) {
    %c0_i32 = arith.constant 0 : i32
    %c0_i32_0 = arith.constant 0 : i32
    %c0_i32_1 = arith.constant 0 : i32
    return %c0_i32, %c0_i32_0 : i32, i32
  }
  func.func @transform_6(%arg0: i32) -> (i32, i32) {
    %c0_i32 = arith.constant 0 : i32
    %c0_i32_0 = arith.constant 0 : i32
    %c0_i32_1 = arith.constant 0 : i32
    return %c0_i32, %c0_i32_0 : i32, i32
  }
  func.func @transform_7(%arg0: i32) -> (i32, i32) {
    %c0_i32 = arith.constant 0 : i32
    %c0_i32_0 = arith.constant 0 : i32
    return %arg0, %c0_i32 : i32, i32
  }
}

</mosaic_0001>

<llo_original>
// kernel: tpu_custom_call.1
$region0: #{tpu_custom_call.1}
  #allocation0 [shape = 'u32[]', space=smem, size = 0x4, offset = 0x4, fixed_abs, tag = 'smem constant byte address 0x4 - core index']
  #allocation1 [shape = 'u32[144,128]{1,0:T(1,128)}', space=vmem, size = 0x12000, scoped, tag = 'internal scratch']
  %s0 = inlined_call_operand.vmem [shape: f32[56,32], index: 0, kind: input, shape index: {}]
  %s1 = inlined_call_operand.vmem [shape: f32[32,128], index: 1, kind: input, shape index: {}]
  %s2 = inlined_call_operand.vmem [shape: f32[1,128], index: 2, kind: input, shape index: {}]
  %s3 = inlined_call_operand.hbm [shape: f32[128,128], index: 3, kind: input, shape index: {}]
  %s4 = inlined_call_operand.vmem [shape: f32[1,128], index: 4, kind: input, shape index: {}]
  %s5 = inlined_call_operand.hbm [shape: f32[128,128], index: 5, kind: input, shape index: {}]
  %s6 = inlined_call_operand.vmem [shape: f32[1,128], index: 6, kind: input, shape index: {}]
  %s7 = inlined_call_operand.hbm [shape: f32[56,128], index: 7, kind: output, shape index: {}]
  %s8 = sld [smem:[#allocation0]]
  $region46: #{tpu_custom_call.1} parent=0
    _
  %s10 = ssub.s32 1, %s8
  %s11 = scalar_select 0, %s10, %s8
  $region1: #{tpu_custom_call.1} parent=0
    #allocation2 [shape = 'u8[65536]{0}', space=vmem, size = 0x10000, scoped, tag = 'input window, operand 3, single buffered']
    #allocation3 [shape = 's32[1]{0}', space=sflag, size = 0x4, scoped, tag = 'scoped memory for tpu_custom_call.1']
    #allocation4 [shape = 's32[1]{0}', space=sflag, size = 0x4, scoped, tag = 'scoped memory for tpu_custom_call.1']
    #allocation5 [shape = 'u8[65536]{0}', space=vmem, size = 0x10000, scoped, tag = 'input window, operand 5, single buffered']
    #allocation6 [shape = 's32[1]{0}', space=sflag, size = 0x4, scoped, tag = 'scoped memory for tpu_custom_call.1']
    #allocation7 [shape = 'u8[28672]{0}', space=vmem, size = 0x7000, scoped, tag = 'output window, operand 0, single buffered']
    %12 = vsyncpa [#allocation3], 0
    %13 = vsyncpa [#allocation6], 0
    %14 = vsyncpa [#allocation4], 0
    // Predicated region
    $region2: #{tpu_custom_call.1} parent=1 // pred_check
      _
    $region3: #{tpu_custom_call.1} parent=1 // pred_check_branch
      %16 = sbr.rel (0) target = $region5
    $region4: #{tpu_custom_call.1} parent=1 // pred_region
      _
    $region5: #{tpu_custom_call.1} parent=1 // pred_fallthru
      _
    // Predicated region
    $region6: #{tpu_custom_call.1} parent=1 // pred_check
      _
    $region7: #{tpu_custom_call.1} parent=1 // pred_check_branch
      %18 = sbr.rel (0) target = $region9
    $region8: #{tpu_custom_call.1} parent=1 // pred_region
      _
    $region9: #{tpu_custom_call.1} parent=1 // pred_fallthru
      _
    // Predicated region
    $region10: #{tpu_custom_call.1} parent=1 // pred_check
      _
    $region11: #{tpu_custom_call.1} parent=1 // pred_check_branch
      %20 = sbr.rel (0) target = $region13
    $region12: #{tpu_custom_call.1} parent=1 // pred_region
      _
    $region13: #{tpu_custom_call.1} parent=1 // pred_fallthru
      _
    // Predicated region
    $region14: #{tpu_custom_call.1} parent=1 // pred_check
      _
    $region15: #{tpu_custom_call.1} parent=1 // pred_check_branch
      %22 = sbr.rel (0) target = $region17
    $region16: #{tpu_custom_call.1} parent=1 // pred_region
      %s24 = ssub.s32 2048, 2048
      %25 = vsyncadd [#allocation3], %s24
      %s26 = sshll.u32 [#allocation2], 4
      %s27 = int_to_ptr.vmem [resolvable:$true] %s26
      %32 = dma.hbm_to_vmem [thread:$0]  %s3, 2048, %s27, [#allocation3], 128, 128, 8
    $region17: #{tpu_custom_call.1} parent=1 // pred_fallthru
      _
    // Predicated region
    $region18: #{tpu_custom_call.1} parent=1 // pred_check
      _
    $region19: #{tpu_custom_call.1} parent=1 // pred_check_branch
      %34 = sbr.rel (0) target = $region21
    $region20: #{tpu_custom_call.1} parent=1 // pred_region
      _
    $region21: #{tpu_custom_call.1} parent=1 // pred_fallthru
      _
    // Predicated region
    $region22: #{tpu_custom_call.1} parent=1 // pred_check
      _
    $region23: #{tpu_custom_call.1} parent=1 // pred_check_branch
      %36 = sbr.rel (0) target = $region25
    $region24: #{tpu_custom_call.1} parent=1 // pred_region
      %s38 = ssub.s32 2048, 2048
      %39 = vsyncadd [#allocation6], %s38
      %s40 = sshll.u32 [#allocation5], 4
      %s41 = int_to_ptr.vmem [resolvable:$true] %s40
      %46 = dma.hbm_to_vmem [thread:$0]  %s5, 2048, %s41, [#allocation6], 128, 128, 8
    $region25: #{tpu_custom_call.1} parent=1 // pred_fallthru
      _
    // Predicated region
    $region26: #{tpu_custom_call.1} parent=1 // pred_check
      _
    $region27: #{tpu_custom_call.1} parent=1 // pred_check_branch
      %48 = sbr.rel (0) target = $region29
    $region28: #{tpu_custom_call.1} parent=1 // pred_region
      _
    $region29: #{tpu_custom_call.1} parent=1 // pred_fallthru
      _
    // Predicated region
    $region30: #{tpu_custom_call.1} parent=1 // pred_check
      _
    $region31: #{tpu_custom_call.1} parent=1 // pred_check_branch
      %50 = sbr.rel (0) target = $region33
    $region32: #{tpu_custom_call.1} parent=1 // pred_region
      %51 = dma.done [#allocation3], 2048
    $region33: #{tpu_custom_call.1} parent=1 // pred_fallthru
      _
    // Predicated region
    $region34: #{tpu_custom_call.1} parent=1 // pred_check
      _
    $region35: #{tpu_custom_call.1} parent=1 // pred_check_branch
      %53 = sbr.rel (0) target = $region37
    $region36: #{tpu_custom_call.1} parent=1 // pred_region
      %54 = dma.done [#allocation6], 2048
    $region37: #{tpu_custom_call.1} parent=1 // pred_fallthru
      _
    %v55 = vld [vmem:[%s0] sm:$0xff]
    %v56 = vld [vmem:[%s0 + $0x8] sm:$0xff]
    %v57 = vld [vmem:[%s0 + $0x10] sm:$0xff]
    %v58 = vld [vmem:[%s0 + $0x18] sm:$0xff]
    %v59 = vld [vmem:[%s0 + $0x20] sm:$0xff]
    %v60 = vld [vmem:[%s0 + $0x28] sm:$0xff]
    %v61 = vld [vmem:[%s0 + $0x30] sm:$0xff]
    %v62 = vld [vmem:[%s1] sm:$0xff]
    %v63 = vld [vmem:[%s1 + $0x8] sm:$0xff]
    %v64 = vld [vmem:[%s1 + $0x10] sm:$0xff]
    %v65 = vld [vmem:[%s1 + $0x18] sm:$0xff]
    %v66 = vld [vmem:[%s2] sm:$0x1]
    %v68 = vlaneseq
    %v69 = vshrl.u32 %v68, 7
    %v70 = vsub.s32 0, %v69
    %v71 = vrot.slane %v66, %v70
    %vm73 = vcmask 261120
    %v75 = vsel %vm73, %v55, 0
    %v78 = vsel %vm73, %v56, 0
    %v81 = vsel %vm73, %v57, 0
    %v84 = vsel %vm73, %v58, 0
    %v87 = vsel %vm73, %v59, 0
    %v90 = vsel %vm73, %v60, 0
    %v93 = vsel %vm73, %v61, 0
    %95 = vmatprep.subr.mxu0 0.0
    %96 = vmatpush1.msra.mxu0 0.0
    %97 = vmatprep.subr.mxu0 0.0
    %98 = vmatpush1.msra.mxu0 0.0
    %99 = vmatprep.subr.mxu0 0.0
    %100 = vmatpush1.msra.mxu0 0.0
    %101 = vmatprep.subr.mxu0 0.0
    %102 = vmatpush1.msra.mxu0 0.0
    %103 = vmatprep.subr.mxu0 0.0
    %104 = vmatpush1.msra.mxu0 0.0
    %105 = vmatprep.subr.mxu0 0.0
    %106 = vmatpush1.msra.mxu0 0.0
    %107 = vmatprep.subr.mxu0 0.0
    %108 = vmatpush1.msra.mxu0 0.0
    %109 = vmatprep.subr.mxu0 0.0
    %110 = vmatpush1.msra.mxu0 0.0
    %111 = vmatprep.subr.mxu0 0.0
    %112 = vmatpush1.msra.mxu0 0.0
    %113 = vmatprep.subr.mxu0 0.0
    %114 = vmatpush1.msra.mxu0 0.0
    %115 = vmatprep.subr.mxu0 0.0
    %116 = vmatpush1.msra.mxu0 0.0
    %117 = vmatprep.subr.mxu0 0.0
    %118 = vmatpush1.msra.mxu0 0.0
    %119 = vmatprep.subr.mxu0 0.0
    %120 = vmatpush1.msra.mxu0 %v65
    %121 = vmatprep.subr.mxu0 0.0
    %122 = vmatpush1.msra.mxu0 %v64
    %123 = vmatprep.subr.mxu0 0.0
    %124 = vmatpush1.msra.mxu0 %v63
    %125 = vmatprep.subr.mxu0 0.0
    %126 = vmatpush1.msra.mxu0 %v62
    %127 = vmatprep.subr.mxu0 0.0
    %128 = vmatpush2.msra.mxu0 0.0
    %129 = vmatprep.subr.mxu0 0.0
    %130 = vmatpush2.msra.mxu0 0.0
    %131 = vmatprep.subr.mxu0 0.0
    %132 = vmatpush2.msra.mxu0 0.0
    %133 = vmatprep.subr.mxu0 0.0
    %134 = vmatpush2.msra.mxu0 0.0
    %135 = vmatprep.subr.mxu0 0.0
    %136 = vmatpush2.msra.mxu0 0.0
    %137 = vmatprep.subr.mxu0 0.0
    %138 = vmatpush2.msra.mxu0 0.0
    %139 = vmatprep.subr.mxu0 0.0
    %140 = vmatpush2.msra.mxu0 0.0
    %141 = vmatprep.subr.mxu0 0.0
    %142 = vmatpush2.msra.mxu0 0.0
    %143 = vmatprep.subr.mxu0 0.0
    %144 = vmatpush2.msra.mxu0 0.0
    %145 = vmatprep.subr.mxu0 0.0
    %146 = vmatpush2.msra.mxu0 0.0
    %147 = vmatprep.subr.mxu0 0.0
    %148 = vmatpush2.msra.mxu0 0.0
    %149 = vmatprep.subr.mxu0 0.0
    %150 = vmatpush2.msra.mxu0 0.0
    %151 = vmatprep.subr.mxu0 0.0
    %152 = vmatpush2.msra.mxu0 0.0
    %153 = vmatprep.subr.mxu0 0.0
    %154 = vmatpush2.msra.mxu0 0.0
    %155 = vmatprep.subr.mxu0 0.0
    %156 = vmatpush2.msra.mxu0 0.0
    %157 = vmatprep.subr.mxu0 0.0
    %158 = vmatpush2.msra.mxu0 0.0
    %159 = vmatprep.mubr.f32.mxu0 0.0
    %160 = vmatmul.mubr.f32.gmra.mxu0 %v75
    %v161 = vpop.f32.mrf.mxu0
    %v162 = vadd.f32 %v71, %v161
    %v163 = vpop.f32.mrf.mxu0
    %164 = vmatprep.mubr.f32.mxu0 0.0
    %165 = vmatmul.mubr.f32.gmra.mxu0 %v78
    %v166 = vpop.f32.mrf.mxu0
    %v167 = vadd.f32 %v71, %v166
    %v168 = vpop.f32.mrf.mxu0
    %169 = vmatprep.mubr.f32.mxu0 0.0
    %170 = vmatmul.mubr.f32.gmra.mxu0 %v81
    %v171 = vpop.f32.mrf.mxu0
    %v172 = vadd.f32 %v71, %v171
    %v173 = vpop.f32.mrf.mxu0
    %174 = vmatprep.mubr.f32.mxu0 0.0
    %175 = vmatmul.mubr.f32.gmra.mxu0 %v84
    %v176 = vpop.f32.mrf.mxu0
    %v177 = vadd.f32 %v71, %v176
    %v178 = vpop.f32.mrf.mxu0
    %179 = vmatprep.mubr.f32.mxu0 0.0
    %180 = vmatmul.mubr.f32.gmra.mxu0 %v87
    %v181 = vpop.f32.mrf.mxu0
    %v182 = vadd.f32 %v71, %v181
    %v183 = vpop.f32.mrf.mxu0
    %184 = vmatprep.mubr.f32.mxu0 0.0
    %185 = vmatmul.mubr.f32.gmra.mxu0 %v90
    %v186 = vpop.f32.mrf.mxu0
    %v187 = vadd.f32 %v71, %v186
    %v188 = vpop.f32.mrf.mxu0
    %189 = vmatprep.mubr.f32.mxu0 0.0
    %190 = vmatmul.mubr.f32.gmra.mxu0 %v93
    %v191 = vpop.f32.mrf.mxu0
    %v192 = vadd.f32 %v71, %v191
    %v193 = vpop.f32.mrf.mxu0
    %194 = vdwg.mxu0
    %v195 = vmax.f32 %v162, 0.0
    %v196 = vmax.f32 %v167, 0.0
    %v197 = vmax.f32 %v172, 0.0
    %v198 = vmax.f32 %v177, 0.0
    %v199 = vmax.f32 %v182, 0.0
    %v200 = vmax.f32 %v187, 0.0
    %v201 = vmax.f32 %v192, 0.0
    %v202 = vld [vmem:[#allocation2] sm:$0xff]
    %v203 = vld [vmem:[#allocation2 + $0x8] sm:$0xff]
    %v204 = vld [vmem:[#allocation2 + $0x10] sm:$0xff]
    %v205 = vld [vmem:[#allocation2 + $0x18] sm:$0xff]
    %v206 = vld [vmem:[#allocation2 + $0x20] sm:$0xff]
    %v207 = vld [vmem:[#allocation2 + $0x28] sm:$0xff]
    %v208 = vld [vmem:[#allocation2 + $0x30] sm:$0xff]
    %v209 = vld [vmem:[#allocation2 + $0x38] sm:$0xff]
    %v210 = vld [vmem:[#allocation2 + $0x40] sm:$0xff]
    %v211 = vld [vmem:[#allocation2 + $0x48] sm:$0xff]
    %v212 = vld [vmem:[#allocation2 + $0x50] sm:$0xff]
    %v213 = vld [vmem:[#allocation2 + $0x58] sm:$0xff]
    %v214 = vld [vmem:[#allocation2 + $0x60] sm:$0xff]
    %v215 = vld [vmem:[#allocation2 + $0x68] sm:$0xff]
    %v216 = vld [vmem:[#allocation2 + $0x70] sm:$0xff]
    %v217 = vld [vmem:[#allocation2 + $0x78] sm:$0xff]
    %v218 = vld [vmem:[%s4] sm:$0x1]
    %v220 = vlaneseq
    %v221 = vshrl.u32 %v220, 7
    %v222 = vsub.s32 0, %v221
    %v223 = vrot.slane %v218, %v222
    %225 = vmatprep.subr.mxu0 0.0
    %226 = vmatpush1.msra.mxu0 %v217
    %227 = vmatprep.subr.mxu0 0.0
    %228 = vmatpush1.msra.mxu0 %v216
    %229 = vmatprep.subr.mxu0 0.0
    %230 = vmatpush1.msra.mxu0 %v215
    %231 = vmatprep.subr.mxu0 0.0
    %232 = vmatpush1.msra.mxu0 %v214
    %233 = vmatprep.subr.mxu0 0.0
    %234 = vmatpush1.msra.mxu0 %v213
    %235 = vmatprep.subr.mxu0 0.0
    %236 = vmatpush1.msra.mxu0 %v212
    %237 = vmatprep.subr.mxu0 0.0
    %238 = vmatpush1.msra.mxu0 %v211
    %239 = vmatprep.subr.mxu0 0.0
    %240 = vmatpush1.msra.mxu0 %v210
    %241 = vmatprep.subr.mxu0 0.0
    %242 = vmatpush1.msra.mxu0 %v209
    %243 = vmatprep.subr.mxu0 0.0
    %244 = vmatpush1.msra.mxu0 %v208
    %245 = vmatprep.subr.mxu0 0.0
    %246 = vmatpush1.msra.mxu0 %v207
    %247 = vmatprep.subr.mxu0 0.0
    %248 = vmatpush1.msra.mxu0 %v206
    %249 = vmatprep.subr.mxu0 0.0
    %250 = vmatpush1.msra.mxu0 %v205
    %251 = vmatprep.subr.mxu0 0.0
    %252 = vmatpush1.msra.mxu0 %v204
    %253 = vmatprep.subr.mxu0 0.0
    %254 = vmatpush1.msra.mxu0 %v203
    %255 = vmatprep.subr.mxu0 0.0
    %256 = vmatpush1.msra.mxu0 %v202
    %257 = vmatprep.subr.mxu0 0.0
    %258 = vmatpush2.msra.mxu0 0.0
    %259 = vmatprep.subr.mxu0 0.0
    %260 = vmatpush2.msra.mxu0 0.0
    %261 = vmatprep.subr.mxu0 0.0
    %262 = vmatpush2.msra.mxu0 0.0
    %263 = vmatprep.subr.mxu0 0.0
    %264 = vmatpush2.msra.mxu0 0.0
    %265 = vmatprep.subr.mxu0 0.0
    %266 = vmatpush2.msra.mxu0 0.0
    %267 = vmatprep.subr.mxu0 0.0
    %268 = vmatpush2.msra.mxu0 0.0
    %269 = vmatprep.subr.mxu0 0.0
    %270 = vmatpush2.msra.mxu0 0.0
    %271 = vmatprep.subr.mxu0 0.0
    %272 = vmatpush2.msra.mxu0 0.0
    %273 = vmatprep.subr.mxu0 0.0
    %274 = vmatpush2.msra.mxu0 0.0
    %275 = vmatprep.subr.mxu0 0.0
    %276 = vmatpush2.msra.mxu0 0.0
    %277 = vmatprep.subr.mxu0 0.0
    %278 = vmatpush2.msra.mxu0 0.0
    %279 = vmatprep.subr.mxu0 0.0
    %280 = vmatpush2.msra.mxu0 0.0
    %281 = vmatprep.subr.mxu0 0.0
    %282 = vmatpush2.msra.mxu0 0.0
    %283 = vmatprep.subr.mxu0 0.0
    %284 = vmatpush2.msra.mxu0 0.0
    %285 = vmatprep.subr.mxu0 0.0
    %286 = vmatpush2.msra.mxu0 0.0
    %287 = vmatprep.subr.mxu0 0.0
    %288 = vmatpush2.msra.mxu0 0.0
    %289 = vmatprep.mubr.f32.mxu0 0.0
    %290 = vmatmul.mubr.f32.gmra.mxu0 %v195
    %v291 = vpop.f32.mrf.mxu0
    %v292 = vadd.f32 %v223, %v291
    %v293 = vpop.f32.mrf.mxu0
    %294 = vmatprep.mubr.f32.mxu0 0.0
    %295 = vmatmul.mubr.f32.gmra.mxu0 %v196
    %v296 = vpop.f32.mrf.mxu0
    %v297 = vadd.f32 %v223, %v296
    %v298 = vpop.f32.mrf.mxu0
    %299 = vmatprep.mubr.f32.mxu0 0.0
    %300 = vmatmul.mubr.f32.gmra.mxu0 %v197
    %v301 = vpop.f32.mrf.mxu0
    %v302 = vadd.f32 %v223, %v301
    %v303 = vpop.f32.mrf.mxu0
    %304 = vmatprep.mubr.f32.mxu0 0.0
    %305 = vmatmul.mubr.f32.gmra.mxu0 %v198
    %v306 = vpop.f32.mrf.mxu0
    %v307 = vadd.f32 %v223, %v306
    %v308 = vpop.f32.mrf.mxu0
    %309 = vmatprep.mubr.f32.mxu0 0.0
    %310 = vmatmul.mubr.f32.gmra.mxu0 %v199
    %v311 = vpop.f32.mrf.mxu0
    %v312 = vadd.f32 %v223, %v311
    %v313 = vpop.f32.mrf.mxu0
    %314 = vmatprep.mubr.f32.mxu0 0.0
    %315 = vmatmul.mubr.f32.gmra.mxu0 %v200
    %v316 = vpop.f32.mrf.mxu0
    %v317 = vadd.f32 %v223, %v316
    %v318 = vpop.f32.mrf.mxu0
    %319 = vmatprep.mubr.f32.mxu0 0.0
    %320 = vmatmul.mubr.f32.gmra.mxu0 %v201
    %v321 = vpop.f32.mrf.mxu0
    %v322 = vadd.f32 %v223, %v321
    %v323 = vpop.f32.mrf.mxu0
    %324 = vdwg.mxu0
    %v325 = vmax.f32 %v292, 0.0
    %v326 = vmax.f32 %v297, 0.0
    %v327 = vmax.f32 %v302, 0.0
    %v328 = vmax.f32 %v307, 0.0
    %v329 = vmax.f32 %v312, 0.0
    %v330 = vmax.f32 %v317, 0.0
    %v331 = vmax.f32 %v322, 0.0
    %v332 = vld [vmem:[#allocation5] sm:$0xff]
    %v333 = vld [vmem:[#allocation5 + $0x8] sm:$0xff]
    %v334 = vld [vmem:[#allocation5 + $0x10] sm:$0xff]
    %v335 = vld [vmem:[#allocation5 + $0x18] sm:$0xff]
    %v336 = vld [vmem:[#allocation5 + $0x20] sm:$0xff]
    %v337 = vld [vmem:[#allocation5 + $0x28] sm:$0xff]
    %v338 = vld [vmem:[#allocation5 + $0x30] sm:$0xff]
    %v339 = vld [vmem:[#allocation5 + $0x38] sm:$0xff]
    %v340 = vld [vmem:[#allocation5 + $0x40] sm:$0xff]
    %v341 = vld [vmem:[#allocation5 + $0x48] sm:$0xff]
    %v342 = vld [vmem:[#allocation5 + $0x50] sm:$0xff]
    %v343 = vld [vmem:[#allocation5 + $0x58] sm:$0xff]
    %v344 = vld [vmem:[#allocation5 + $0x60] sm:$0xff]
    %v345 = vld [vmem:[#allocation5 + $0x68] sm:$0xff]
    %v346 = vld [vmem:[#allocation5 + $0x70] sm:$0xff]
    %v347 = vld [vmem:[#allocation5 + $0x78] sm:$0xff]
    %v348 = vld [vmem:[%s6] sm:$0x1]
    %v350 = vlaneseq
    %v351 = vshrl.u32 %v350, 7
    %v352 = vsub.s32 0, %v351
    %v353 = vrot.slane %v348, %v352
    %355 = vmatprep.subr.mxu0 0.0
    %356 = vmatpush1.msra.mxu0 %v347
    %357 = vmatprep.subr.mxu0 0.0
    %358 = vmatpush1.msra.mxu0 %v346
    %359 = vmatprep.subr.mxu0 0.0
    %360 = vmatpush1.msra.mxu0 %v345
    %361 = vmatprep.subr.mxu0 0.0
    %362 = vmatpush1.msra.mxu0 %v344
    %363 = vmatprep.subr.mxu0 0.0
    %364 = vmatpush1.msra.mxu0 %v343
    %365 = vmatprep.subr.mxu0 0.0
    %366 = vmatpush1.msra.mxu0 %v342
    %367 = vmatprep.subr.mxu0 0.0
    %368 = vmatpush1.msra.mxu0 %v341
    %369 = vmatprep.subr.mxu0 0.0
    %370 = vmatpush1.msra.mxu0 %v340
    %371 = vmatprep.subr.mxu0 0.0
    %372 = vmatpush1.msra.mxu0 %v339
    %373 = vmatprep.subr.mxu0 0.0
    %374 = vmatpush1.msra.mxu0 %v338
    %375 = vmatprep.subr.mxu0 0.0
    %376 = vmatpush1.msra.mxu0 %v337
    %377 = vmatprep.subr.mxu0 0.0
    %378 = vmatpush1.msra.mxu0 %v336
    %379 = vmatprep.subr.mxu0 0.0
    %380 = vmatpush1.msra.mxu0 %v335
    %381 = vmatprep.subr.mxu0 0.0
    %382 = vmatpush1.msra.mxu0 %v334
    %383 = vmatprep.subr.mxu0 0.0
    %384 = vmatpush1.msra.mxu0 %v333
    %385 = vmatprep.subr.mxu0 0.0
    %386 = vmatpush1.msra.mxu0 %v332
    %387 = vmatprep.subr.mxu0 0.0
    %388 = vmatpush2.msra.mxu0 0.0
    %389 = vmatprep.subr.mxu0 0.0
    %390 = vmatpush2.msra.mxu0 0.0
    %391 = vmatprep.subr.mxu0 0.0
    %392 = vmatpush2.msra.mxu0 0.0
    %393 = vmatprep.subr.mxu0 0.0
    %394 = vmatpush2.msra.mxu0 0.0
    %395 = vmatprep.subr.mxu0 0.0
    %396 = vmatpush2.msra.mxu0 0.0
    %397 = vmatprep.subr.mxu0 0.0
    %398 = vmatpush2.msra.mxu0 0.0
    %399 = vmatprep.subr.mxu0 0.0
    %400 = vmatpush2.msra.mxu0 0.0
    %401 = vmatprep.subr.mxu0 0.0
    %402 = vmatpush2.msra.mxu0 0.0
    %403 = vmatprep.subr.mxu0 0.0
    %404 = vmatpush2.msra.mxu0 0.0
    %405 = vmatprep.subr.mxu0 0.0
    %406 = vmatpush2.msra.mxu0 0.0
    %407 = vmatprep.subr.mxu0 0.0
    %408 = vmatpush2.msra.mxu0 0.0
    %409 = vmatprep.subr.mxu0 0.0
    %410 = vmatpush2.msra.mxu0 0.0
    %411 = vmatprep.subr.mxu0 0.0
    %412 = vmatpush2.msra.mxu0 0.0
    %413 = vmatprep.subr.mxu0 0.0
    %414 = vmatpush2.msra.mxu0 0.0
    %415 = vmatprep.subr.mxu0 0.0
    %416 = vmatpush2.msra.mxu0 0.0
    %417 = vmatprep.subr.mxu0 0.0
    %418 = vmatpush2.msra.mxu0 0.0
    %419 = vmatprep.mubr.f32.mxu0 0.0
    %420 = vmatmul.mubr.f32.gmra.mxu0 %v325
    %v421 = vpop.f32.mrf.mxu0
    %v422 = vadd.f32 %v353, %v421
    %v423 = vpop.f32.mrf.mxu0
    %424 = vmatprep.mubr.f32.mxu0 0.0
    %425 = vmatmul.mubr.f32.gmra.mxu0 %v326
    %v426 = vpop.f32.mrf.mxu0
    %v427 = vadd.f32 %v353, %v426
    %v428 = vpop.f32.mrf.mxu0
    %429 = vmatprep.mubr.f32.mxu0 0.0
    %430 = vmatmul.mubr.f32.gmra.mxu0 %v327
    %v431 = vpop.f32.mrf.mxu0
    %v432 = vadd.f32 %v353, %v431
    %v433 = vpop.f32.mrf.mxu0
    %434 = vmatprep.mubr.f32.mxu0 0.0
    %435 = vmatmul.mubr.f32.gmra.mxu0 %v328
    %v436 = vpop.f32.mrf.mxu0
    %v437 = vadd.f32 %v353, %v436
    %v438 = vpop.f32.mrf.mxu0
    %439 = vmatprep.mubr.f32.mxu0 0.0
    %440 = vmatmul.mubr.f32.gmra.mxu0 %v329
    %v441 = vpop.f32.mrf.mxu0
    %v442 = vadd.f32 %v353, %v441
    %v443 = vpop.f32.mrf.mxu0
    %444 = vmatprep.mubr.f32.mxu0 0.0
    %445 = vmatmul.mubr.f32.gmra.mxu0 %v330
    %v446 = vpop.f32.mrf.mxu0
    %v447 = vadd.f32 %v353, %v446
    %v448 = vpop.f32.mrf.mxu0
    %449 = vmatprep.mubr.f32.mxu0 0.0
    %450 = vmatmul.mubr.f32.gmra.mxu0 %v331
    %v451 = vpop.f32.mrf.mxu0
    %v452 = vadd.f32 %v353, %v451
    %v453 = vpop.f32.mrf.mxu0
    %454 = vdwg.mxu0
    %v455 = vxor.u32 %v422, 2147483648
    %v456 = vxor.u32 %v427, 2147483648
    %v457 = vxor.u32 %v432, 2147483648
    %v458 = vxor.u32 %v437, 2147483648
    %v459 = vxor.u32 %v442, 2147483648
    %v460 = vxor.u32 %v447, 2147483648
    %v461 = vxor.u32 %v452, 2147483648
    %v462 = vmul.f32 %v455, 1.442695
    %v463 = vpow.pop %v462
    %v464 = vmul.f32 %v456, 1.442695
    %v465 = vpow.pop %v464
    %v466 = vmul.f32 %v457, 1.442695
    %v467 = vpow.pop %v466
    %v468 = vmul.f32 %v458, 1.442695
    %v469 = vpow.pop %v468
    %v470 = vmul.f32 %v459, 1.442695
    %v471 = vpow.pop %v470
    %v472 = vmul.f32 %v460, 1.442695
    %v473 = vpow.pop %v472
    %v474 = vmul.f32 %v461, 1.442695
    %v475 = vpow.pop %v474
    %v476 = vadd.f32 %v463, 1.0
    %v477 = vadd.f32 %v465, 1.0
    %v478 = vadd.f32 %v467, 1.0
    %v479 = vadd.f32 %v469, 1.0
    %v480 = vadd.f32 %v471, 1.0
    %v481 = vadd.f32 %v473, 1.0
    %v482 = vadd.f32 %v475, 1.0
    %v483 = vrcp.pop %v476
    %v484 = vmul.f32 1.0, %v483
    %v485 = vrcp.pop %v477
    %v486 = vmul.f32 1.0, %v485
    %v487 = vrcp.pop %v478
    %v488 = vmul.f32 1.0, %v487
    %v489 = vrcp.pop %v479
    %v490 = vmul.f32 1.0, %v489
    %v491 = vrcp.pop %v480
    %v492 = vmul.f32 1.0, %v491
    %v493 = vrcp.pop %v481
    %v494 = vmul.f32 1.0, %v493
    %v495 = vrcp.pop %v482
    %v496 = vmul.f32 1.0, %v495
    %497 = vst [vmem:[#allocation7] sm:$0xff] %v484
    %498 = vst [vmem:[#allocation7 + $0x8] sm:$0xff] %v486
    %499 = vst [vmem:[#allocation7 + $0x10] sm:$0xff] %v488
    %500 = vst [vmem:[#allocation7 + $0x18] sm:$0xff] %v490
    %501 = vst [vmem:[#allocation7 + $0x20] sm:$0xff] %v492
    %502 = vst [vmem:[#allocation7 + $0x28] sm:$0xff] %v494
    %503 = vst [vmem:[#allocation7 + $0x30] sm:$0xff] %v496
    // Predicated region
    $region38: #{tpu_custom_call.1} parent=1 // pred_check
      _
    $region39: #{tpu_custom_call.1} parent=1 // pred_check_branch
      %505 = sbr.rel (0) target = $region41
    $region40: #{tpu_custom_call.1} parent=1 // pred_region
      %s507 = ssub.s32 896, 896
      %508 = vsyncadd [#allocation4], %s507
      %s509 = sshll.u32 [#allocation7], 4
      %s510 = int_to_ptr.vmem [resolvable:$true] %s509
      %515 = dma.vmem_to_hbm [thread:$0]  %s510, 896, %s7, [#allocation4], 128, 128, 8
    $region41: #{tpu_custom_call.1} parent=1 // pred_fallthru
      _
    // Predicated region
    $region42: #{tpu_custom_call.1} parent=1 // pred_check
      _
    $region43: #{tpu_custom_call.1} parent=1 // pred_check_branch
      %517 = sbr.rel (0) target = $region45
    $region44: #{tpu_custom_call.1} parent=1 // pred_region
      %518 = dma.done [#allocation4], 896
    $region45: #{tpu_custom_call.1} parent=1 // pred_fallthru
      _
    %519 = vsyncpa [#allocation3], 1
    %520 = vsyncpa [#allocation6], 1
    %521 = vsyncpa [#allocation4], 1

</llo_original>
